<compile_context>
chip_gen: v5e
topology: v5e:2x2
jax: 0.10.0
libtpu: 0.0.40
codegen_flags: <defaults>
</compile_context>

<pallas_src>
import jax
import jax.numpy as jnp
from jax.experimental import pallas as pl
from jax.experimental.pallas import tpu as pltpu


# ---------------------------------------------------------------------------
# Fast path: full embedding table resident in VMEM (no DMAs, no semaphores).
# ---------------------------------------------------------------------------
def _clip_embedding_vmem_kernel(tokens_ref, tok_emb_ref, pos_emb_ref, out_ref):
    # tokens_ref:  SMEM (B*T,) int32     scalar-prefetched, flattened, pre-clamped ids
    # tok_emb_ref: VMEM (V, E)           full token-embedding table (resident across grid)
    # pos_emb_ref: VMEM (T, E)           full position table
    # out_ref:     VMEM (Bblk, T, E)     output slab for the current batch block
    g = pl.program_id(0)
    bblk, T, E = out_ref.shape
    base = g * (bblk * T)
    # Hoist all SMEM scalar reads up front.
    ids = [tokens_ref[base + j] for j in range(bblk * T)]
    for i in range(bblk):
        for t in range(T):
            row = tok_emb_ref[pl.ds(ids[i * T + t], 1), :]            # (1, E) dynamic row read
            out_ref[i, pl.ds(t, 1), :] = (
                row + pos_emb_ref[pl.ds(t, 1), :]
            ).astype(out_ref.dtype)


# ---------------------------------------------------------------------------
# HBM-gather path: table stays in HBM; cross-grid-step double-buffered row gather.
# ---------------------------------------------------------------------------
def _clip_embedding_gather_kernel(tokens_ref, tok_emb_hbm, pos_emb_ref, out_ref,
                                  gather_buf, sems):
    # tokens_ref:  SMEM (B*T,) int32      scalar-prefetched, flattened, pre-clamped ids
    # tok_emb_hbm: HBM  (V, E)            raw ref, rows gathered via manual DMA
    # pos_emb_ref: VMEM (T, E)
    # out_ref:     VMEM (Bblk, T, E)
    # gather_buf:  VMEM (2, Bblk, T, E)   double-buffered landing zone (cross-step prefetch)
    # sems:        DMA  (2, Bblk, T)      one semaphore per in-flight row DMA per slot
    g = pl.program_id(0)
    nsteps = pl.num_programs(0)
    bblk, T, E = out_ref.shape

    def issue_gathers(step, slot):
        base = step * (bblk * T)
        # Hoist every SMEM read before the first .start() (and before any .wait()).
        ids = [tokens_ref[base + j] for j in range(bblk * T)]
        for i in range(bblk):
            for t in range(T):
                pltpu.make_async_copy(
                    tok_emb_hbm.at[pl.ds(ids[i * T + t], 1), :],
                    gather_buf.at[slot, i, pl.ds(t, 1), :],
                    sems.at[slot, i, t],
                ).start()

    # Prime slot 0 on the first step only (the batch axis is "arbitrary", so this runs once).
    @pl.when(g == 0)
    def _():
        issue_gathers(0, 0)

    # Prefetch the next step's rows into the other slot before waiting on the current slot.
    @pl.when(g + 1 < nsteps)
    def _():
        issue_gathers(g + 1, (g + 1) % 2)

    slot = g % 2
    for i in range(bblk):
        for t in range(T):
            pltpu.make_async_copy(
                tok_emb_hbm.at[pl.ds(0, 1), :],            # shape-only; wait is on the semaphore
                gather_buf.at[slot, i, pl.ds(t, 1), :],
                sems.at[slot, i, t],
            ).wait()

    # One lane-dense vectorized slab add + unmasked store.
    out_ref[...] = (gather_buf[slot] + pos_emb_ref[...][None, :, :]).astype(out_ref.dtype)


def _pick_block_b(batch, max_block=8):
    for cand in (8, 4, 2, 1):
        if cand <= max_block and cand <= batch and batch % cand == 0:
            return cand
    return 1


# Conservative so the fast path is safe on every generation (v7x: 64 MiB physical VMEM,
# 32 MiB default scoped limit).  Real CLIP f32 tables (~151 MB) never take this path.
_FAST_PATH_TABLE_BYTES = 24 * 1024 * 1024


def clip_embedding(tokens, tok_emb, pos_emb, *, block_b=None, force_hbm_gather=False):
    """tokens: (B, T) int, tok_emb: (V, E), pos_emb: (T, E) -> (B, T, E)."""
    B, T = tokens.shape
    V, E = tok_emb.shape
    assert pos_emb.shape == (T, E)

    pos_emb = pos_emb.astype(tok_emb.dtype)
    # Clamp once on the wrapper side (no per-row scalar clip inside the DMA-issue loop).
    tokens_flat = jnp.clip(tokens.reshape(-1).astype(jnp.int32), 0, V - 1)

    if block_b is None:
        block_b = _pick_block_b(B)
    assert B % block_b == 0, "block_b must divide the batch size"
    grid = (B // block_b,)

    out_shape = jax.ShapeDtypeStruct((B, T, E), tok_emb.dtype)
    out_spec = pl.BlockSpec((block_b, T, E), lambda g, toks: (g, 0, 0))
    pos_spec = pl.BlockSpec((T, E), lambda g, toks: (0, 0))

    table_bytes = V * E * jnp.dtype(tok_emb.dtype).itemsize
    use_fast_path = (not force_hbm_gather) and table_bytes <= _FAST_PATH_TABLE_BYTES
    # TODO(synk): on v5e/v6e (128 MiB VMEM) a bf16 CLIP table (~76 MB) could also take the fast
    # path with a device-aware budget + vmem_limit_bytes; kept conservative so v7x never OOMs.

    if use_fast_path:
        grid_spec = pltpu.PrefetchScalarGridSpec(
            num_scalar_prefetch=1,
            grid=grid,
            in_specs=[
                pl.BlockSpec((V, E), lambda g, toks: (0, 0)),   # full table resident in VMEM
                pos_spec,
            ],
            out_specs=out_spec,
        )
        return pl.pallas_call(
            _clip_embedding_vmem_kernel,
            out_shape=out_shape,
            grid_spec=grid_spec,
            compiler_params=pltpu.CompilerParams(
                dimension_semantics=("parallel",),               # no cross-step state
                vmem_limit_bytes=48 * 1024 * 1024,
            ),
        )(tokens_flat, tok_emb, pos_emb)

    grid_spec = pltpu.PrefetchScalarGridSpec(
        num_scalar_prefetch=1,
        grid=grid,
        in_specs=[
            pl.BlockSpec(memory_space=pl.ANY),                   # table stays in HBM
            pos_spec,
        ],
        out_specs=out_spec,
        scratch_shapes=[
            pltpu.VMEM((2, block_b, T, E), tok_emb.dtype),       # double-buffered gather buffer
            pltpu.SemaphoreType.DMA((2, block_b, T)),
        ],
    )
    return pl.pallas_call(
        _clip_embedding_gather_kernel,
        out_shape=out_shape,
        grid_spec=grid_spec,
        compiler_params=pltpu.CompilerParams(
            # Cross-step prefetch carries state between steps -> this axis must be "arbitrary".
            dimension_semantics=("arbitrary",),
        ),
    )(tokens_flat, tok_emb, pos_emb)


if __name__ == "__main__":
    # Small shapes consistent with the module: CLIPEmbedding(n_vocab, n_embed, n_token)
    n_vocab, n_embed, n_token, batch = 64, 128, 8, 4

    key = jax.random.PRNGKey(0)
    k_tok, k_emb, k_pos = jax.random.split(key, 3)

    # Deterministic synthetic parameters.  position_embedding is zeros in the PyTorch __init__;
    # small deterministic randoms are used here so the add path is actually exercised.
    token_embedding = jax.random.normal(k_emb, (n_vocab, n_embed), dtype=jnp.float32)
    position_embedding = 0.02 * jax.random.normal(k_pos, (n_token, n_embed), dtype=jnp.float32)
    tokens = jax.random.randint(k_tok, (batch, n_token), 0, n_vocab, dtype=jnp.int32)

    # Pure-JAX reference.
    ref = token_embedding[tokens] + position_embedding[None, :, :]

    # Fast path (table resident in VMEM; auto-selected for this tiny table).
    out_fast = jax.block_until_ready(clip_embedding(tokens, token_embedding, position_embedding))
    # HBM-gather path with cross-step double-buffered prefetch (block_b=2 -> 2 grid steps).
    out_hbm = jax.block_until_ready(
        clip_embedding(tokens, token_embedding, position_embedding,
                       block_b=2, force_hbm_gather=True))

    assert out_fast.shape == (batch, n_token, n_embed)
    assert jnp.allclose(out_fast, ref, atol=1e-6, rtol=1e-6), "fast-path mismatch vs reference"
    assert jnp.allclose(out_hbm, ref, atol=1e-6, rtol=1e-6), "gather-path mismatch vs reference"

    print("KERNEL_OK")
</pallas_src>

<mosaic_0001>
module attributes {stable_mosaic.version = 11 : i64} {
  func.func @_clip_embedding_vmem_kernel(%arg0: i32, %arg1: memref<32xi32, #tpu.memory_space<smem>>, %arg2: memref<64x128xf32, #tpu.memory_space<vmem>>, %arg3: memref<8x128xf32, #tpu.memory_space<vmem>>, %arg4: memref<4x8x128xf32, #tpu.memory_space<vmem>>) attributes {dimension_semantics = [#tpu.dimension_semantics<parallel>], iteration_bounds = array<i64: 1>, scalar_prefetch = 1 : i64, scratch_operands = 0 : i64, tpu.core_type = #tpu.core_type<tc>, window_params = [{pipeline_mode = #tpu.pipeline_mode<synchronous>, transform_indices = @transform_0, window_bounds = array<i64: 64, 128>}, {pipeline_mode = #tpu.pipeline_mode<synchronous>, transform_indices = @transform_1, window_bounds = array<i64: 8, 128>}, {transform_indices = @transform_2, window_bounds = array<i64: 4, 8, 128>}]} {
    %c32_i32 = arith.constant 32 : i32
    %0 = arith.muli %arg0, %c32_i32 : i32
    %c0_i32 = arith.constant 0 : i32
    %1 = arith.addi %0, %c0_i32 : i32
    %2 = arith.index_cast %1 : i32 to index
    %3 = memref.load %arg1[%2] : memref<32xi32, #tpu.memory_space<smem>>
    %c1_i32 = arith.constant 1 : i32
    %4 = arith.addi %0, %c1_i32 : i32
    %5 = arith.index_cast %4 : i32 to index
    %6 = memref.load %arg1[%5] : memref<32xi32, #tpu.memory_space<smem>>
    %c2_i32 = arith.constant 2 : i32
    %7 = arith.addi %0, %c2_i32 : i32
    %8 = arith.index_cast %7 : i32 to index
    %9 = memref.load %arg1[%8] : memref<32xi32, #tpu.memory_space<smem>>
    %c3_i32 = arith.constant 3 : i32
    %10 = arith.addi %0, %c3_i32 : i32
    %11 = arith.index_cast %10 : i32 to index
    %12 = memref.load %arg1[%11] : memref<32xi32, #tpu.memory_space<smem>>
    %c4_i32 = arith.constant 4 : i32
    %13 = arith.addi %0, %c4_i32 : i32
    %14 = arith.index_cast %13 : i32 to index
    %15 = memref.load %arg1[%14] : memref<32xi32, #tpu.memory_space<smem>>
    %c5_i32 = arith.constant 5 : i32
    %16 = arith.addi %0, %c5_i32 : i32
    %17 = arith.index_cast %16 : i32 to index
    %18 = memref.load %arg1[%17] : memref<32xi32, #tpu.memory_space<smem>>
    %c6_i32 = arith.constant 6 : i32
    %19 = arith.addi %0, %c6_i32 : i32
    %20 = arith.index_cast %19 : i32 to index
    %21 = memref.load %arg1[%20] : memref<32xi32, #tpu.memory_space<smem>>
    %c7_i32 = arith.constant 7 : i32
    %22 = arith.addi %0, %c7_i32 : i32
    %23 = arith.index_cast %22 : i32 to index
    %24 = memref.load %arg1[%23] : memref<32xi32, #tpu.memory_space<smem>>
    %c8_i32 = arith.constant 8 : i32
    %25 = arith.addi %0, %c8_i32 : i32
    %26 = arith.index_cast %25 : i32 to index
    %27 = memref.load %arg1[%26] : memref<32xi32, #tpu.memory_space<smem>>
    %c9_i32 = arith.constant 9 : i32
    %28 = arith.addi %0, %c9_i32 : i32
    %29 = arith.index_cast %28 : i32 to index
    %30 = memref.load %arg1[%29] : memref<32xi32, #tpu.memory_space<smem>>
    %c10_i32 = arith.constant 10 : i32
    %31 = arith.addi %0, %c10_i32 : i32
    %32 = arith.index_cast %31 : i32 to index
    %33 = memref.load %arg1[%32] : memref<32xi32, #tpu.memory_space<smem>>
    %c11_i32 = arith.constant 11 : i32
    %34 = arith.addi %0, %c11_i32 : i32
    %35 = arith.index_cast %34 : i32 to index
    %36 = memref.load %arg1[%35] : memref<32xi32, #tpu.memory_space<smem>>
    %c12_i32 = arith.constant 12 : i32
    %37 = arith.addi %0, %c12_i32 : i32
    %38 = arith.index_cast %37 : i32 to index
    %39 = memref.load %arg1[%38] : memref<32xi32, #tpu.memory_space<smem>>
    %c13_i32 = arith.constant 13 : i32
    %40 = arith.addi %0, %c13_i32 : i32
    %41 = arith.index_cast %40 : i32 to index
    %42 = memref.load %arg1[%41] : memref<32xi32, #tpu.memory_space<smem>>
    %c14_i32 = arith.constant 14 : i32
    %43 = arith.addi %0, %c14_i32 : i32
    %44 = arith.index_cast %43 : i32 to index
    %45 = memref.load %arg1[%44] : memref<32xi32, #tpu.memory_space<smem>>
    %c15_i32 = arith.constant 15 : i32
    %46 = arith.addi %0, %c15_i32 : i32
    %47 = arith.index_cast %46 : i32 to index
    %48 = memref.load %arg1[%47] : memref<32xi32, #tpu.memory_space<smem>>
    %c16_i32 = arith.constant 16 : i32
    %49 = arith.addi %0, %c16_i32 : i32
    %50 = arith.index_cast %49 : i32 to index
    %51 = memref.load %arg1[%50] : memref<32xi32, #tpu.memory_space<smem>>
    %c17_i32 = arith.constant 17 : i32
    %52 = arith.addi %0, %c17_i32 : i32
    %53 = arith.index_cast %52 : i32 to index
    %54 = memref.load %arg1[%53] : memref<32xi32, #tpu.memory_space<smem>>
    %c18_i32 = arith.constant 18 : i32
    %55 = arith.addi %0, %c18_i32 : i32
    %56 = arith.index_cast %55 : i32 to index
    %57 = memref.load %arg1[%56] : memref<32xi32, #tpu.memory_space<smem>>
    %c19_i32 = arith.constant 19 : i32
    %58 = arith.addi %0, %c19_i32 : i32
    %59 = arith.index_cast %58 : i32 to index
    %60 = memref.load %arg1[%59] : memref<32xi32, #tpu.memory_space<smem>>
    %c20_i32 = arith.constant 20 : i32
    %61 = arith.addi %0, %c20_i32 : i32
    %62 = arith.index_cast %61 : i32 to index
    %63 = memref.load %arg1[%62] : memref<32xi32, #tpu.memory_space<smem>>
    %c21_i32 = arith.constant 21 : i32
    %64 = arith.addi %0, %c21_i32 : i32
    %65 = arith.index_cast %64 : i32 to index
    %66 = memref.load %arg1[%65] : memref<32xi32, #tpu.memory_space<smem>>
    %c22_i32 = arith.constant 22 : i32
    %67 = arith.addi %0, %c22_i32 : i32
    %68 = arith.index_cast %67 : i32 to index
    %69 = memref.load %arg1[%68] : memref<32xi32, #tpu.memory_space<smem>>
    %c23_i32 = arith.constant 23 : i32
    %70 = arith.addi %0, %c23_i32 : i32
    %71 = arith.index_cast %70 : i32 to index
    %72 = memref.load %arg1[%71] : memref<32xi32, #tpu.memory_space<smem>>
    %c24_i32 = arith.constant 24 : i32
    %73 = arith.addi %0, %c24_i32 : i32
    %74 = arith.index_cast %73 : i32 to index
    %75 = memref.load %arg1[%74] : memref<32xi32, #tpu.memory_space<smem>>
    %c25_i32 = arith.constant 25 : i32
    %76 = arith.addi %0, %c25_i32 : i32
    %77 = arith.index_cast %76 : i32 to index
    %78 = memref.load %arg1[%77] : memref<32xi32, #tpu.memory_space<smem>>
    %c26_i32 = arith.constant 26 : i32
    %79 = arith.addi %0, %c26_i32 : i32
    %80 = arith.index_cast %79 : i32 to index
    %81 = memref.load %arg1[%80] : memref<32xi32, #tpu.memory_space<smem>>
    %c27_i32 = arith.constant 27 : i32
    %82 = arith.addi %0, %c27_i32 : i32
    %83 = arith.index_cast %82 : i32 to index
    %84 = memref.load %arg1[%83] : memref<32xi32, #tpu.memory_space<smem>>
    %c28_i32 = arith.constant 28 : i32
    %85 = arith.addi %0, %c28_i32 : i32
    %86 = arith.index_cast %85 : i32 to index
    %87 = memref.load %arg1[%86] : memref<32xi32, #tpu.memory_space<smem>>
    %c29_i32 = arith.constant 29 : i32
    %88 = arith.addi %0, %c29_i32 : i32
    %89 = arith.index_cast %88 : i32 to index
    %90 = memref.load %arg1[%89] : memref<32xi32, #tpu.memory_space<smem>>
    %c30_i32 = arith.constant 30 : i32
    %91 = arith.addi %0, %c30_i32 : i32
    %92 = arith.index_cast %91 : i32 to index
    %93 = memref.load %arg1[%92] : memref<32xi32, #tpu.memory_space<smem>>
    %c31_i32 = arith.constant 31 : i32
    %94 = arith.addi %0, %c31_i32 : i32
    %95 = arith.index_cast %94 : i32 to index
    %96 = memref.load %arg1[%95] : memref<32xi32, #tpu.memory_space<smem>>
    %97 = arith.index_cast %3 : i32 to index
    %c0 = arith.constant 0 : index
    %98 = vector.load %arg2[%97, %c0] : memref<64x128xf32, #tpu.memory_space<vmem>>, vector<1x128xf32>
    %c0_0 = arith.constant 0 : index
    %c0_1 = arith.constant 0 : index
    %99 = vector.load %arg3[%c0_0, %c0_1] : memref<8x128xf32, #tpu.memory_space<vmem>>, vector<1x128xf32>
    %100 = arith.addf %98, %99 : vector<1x128xf32>
    %c0_2 = arith.constant 0 : index
    %c0_3 = arith.constant 0 : index
    %c0_4 = arith.constant 0 : index
    %101 = vector.load %arg4[%c0_2, %c0_3, %c0_4] : memref<4x8x128xf32, #tpu.memory_space<vmem>>, vector<1x1x128xf32>
    %102 = vector.shape_cast %101 : vector<1x1x128xf32> to vector<1x128xf32>
    %103 = vector.shape_cast %100 : vector<1x128xf32> to vector<1x1x128xf32>
    tpu.vector_store %arg4[%c0_2, %c0_3, %c0_4], %103 {strides = array<i32>} : memref<4x8x128xf32, #tpu.memory_space<vmem>>, vector<1x1x128xf32>,
    %104 = arith.index_cast %6 : i32 to index
    %c0_5 = arith.constant 0 : index
    %105 = vector.load %arg2[%104, %c0_5] : memref<64x128xf32, #tpu.memory_space<vmem>>, vector<1x128xf32>
    %c1 = arith.constant 1 : index
    %c0_6 = arith.constant 0 : index
    %106 = vector.load %arg3[%c1, %c0_6] : memref<8x128xf32, #tpu.memory_space<vmem>>, vector<1x128xf32>
    %107 = arith.addf %105, %106 : vector<1x128xf32>
    %c0_7 = arith.constant 0 : index
    %c1_8 = arith.constant 1 : index
    %c0_9 = arith.constant 0 : index
    %108 = vector.load %arg4[%c0_7, %c1_8, %c0_9] : memref<4x8x128xf32, #tpu.memory_space<vmem>>, vector<1x1x128xf32>
    %109 = vector.shape_cast %108 : vector<1x1x128xf32> to vector<1x128xf32>
    %110 = vector.shape_cast %107 : vector<1x128xf32> to vector<1x1x128xf32>
    tpu.vector_store %arg4[%c0_7, %c1_8, %c0_9], %110 {strides = array<i32>} : memref<4x8x128xf32, #tpu.memory_space<vmem>>, vector<1x1x128xf32>,
    %111 = arith.index_cast %9 : i32 to index
    %c0_10 = arith.constant 0 : index
    %112 = vector.load %arg2[%111, %c0_10] : memref<64x128xf32, #tpu.memory_space<vmem>>, vector<1x128xf32>
    %c2 = arith.constant 2 : index
    %c0_11 = arith.constant 0 : index
    %113 = vector.load %arg3[%c2, %c0_11] : memref<8x128xf32, #tpu.memory_space<vmem>>, vector<1x128xf32>
    %114 = arith.addf %112, %113 : vector<1x128xf32>
    %c0_12 = arith.constant 0 : index
    %c2_13 = arith.constant 2 : index
    %c0_14 = arith.constant 0 : index
    %115 = vector.load %arg4[%c0_12, %c2_13, %c0_14] : memref<4x8x128xf32, #tpu.memory_space<vmem>>, vector<1x1x128xf32>
    %116 = vector.shape_cast %115 : vector<1x1x128xf32> to vector<1x128xf32>
    %117 = vector.shape_cast %114 : vector<1x128xf32> to vector<1x1x128xf32>
    tpu.vector_store %arg4[%c0_12, %c2_13, %c0_14], %117 {strides = array<i32>} : memref<4x8x128xf32, #tpu.memory_space<vmem>>, vector<1x1x128xf32>,
    %118 = arith.index_cast %12 : i32 to index
    %c0_15 = arith.constant 0 : index
    %119 = vector.load %arg2[%118, %c0_15] : memref<64x128xf32, #tpu.memory_space<vmem>>, vector<1x128xf32>
    %c3 = arith.constant 3 : index
    %c0_16 = arith.constant 0 : index
    %120 = vector.load %arg3[%c3, %c0_16] : memref<8x128xf32, #tpu.memory_space<vmem>>, vector<1x128xf32>
    %121 = arith.addf %119, %120 : vector<1x128xf32>
    %c0_17 = arith.constant 0 : index
    %c3_18 = arith.constant 3 : index
    %c0_19 = arith.constant 0 : index
    %122 = vector.load %arg4[%c0_17, %c3_18, %c0_19] : memref<4x8x128xf32, #tpu.memory_space<vmem>>, vector<1x1x128xf32>
    %123 = vector.shape_cast %122 : vector<1x1x128xf32> to vector<1x128xf32>
    %124 = vector.shape_cast %121 : vector<1x128xf32> to vector<1x1x128xf32>
    tpu.vector_store %arg4[%c0_17, %c3_18, %c0_19], %124 {strides = array<i32>} : memref<4x8x128xf32, #tpu.memory_space<vmem>>, vector<1x1x128xf32>,
    %125 = arith.index_cast %15 : i32 to index
    %c0_20 = arith.constant 0 : index
    %126 = vector.load %arg2[%125, %c0_20] : memref<64x128xf32, #tpu.memory_space<vmem>>, vector<1x128xf32>
    %c4 = arith.constant 4 : index
    %c0_21 = arith.constant 0 : index
    %127 = vector.load %arg3[%c4, %c0_21] : memref<8x128xf32, #tpu.memory_space<vmem>>, vector<1x128xf32>
    %128 = arith.addf %126, %127 : vector<1x128xf32>
    %c0_22 = arith.constant 0 : index
    %c4_23 = arith.constant 4 : index
    %c0_24 = arith.constant 0 : index
    %129 = vector.load %arg4[%c0_22, %c4_23, %c0_24] : memref<4x8x128xf32, #tpu.memory_space<vmem>>, vector<1x1x128xf32>
    %130 = vector.shape_cast %129 : vector<1x1x128xf32> to vector<1x128xf32>
    %131 = vector.shape_cast %128 : vector<1x128xf32> to vector<1x1x128xf32>
    tpu.vector_store %arg4[%c0_22, %c4_23, %c0_24], %131 {strides = array<i32>} : memref<4x8x128xf32, #tpu.memory_space<vmem>>, vector<1x1x128xf32>,
    %132 = arith.index_cast %18 : i32 to index
    %c0_25 = arith.constant 0 : index
    %133 = vector.load %arg2[%132, %c0_25] : memref<64x128xf32, #tpu.memory_space<vmem>>, vector<1x128xf32>
    %c5 = arith.constant 5 : index
    %c0_26 = arith.constant 0 : index
    %134 = vector.load %arg3[%c5, %c0_26] : memref<8x128xf32, #tpu.memory_space<vmem>>, vector<1x128xf32>
    %135 = arith.addf %133, %134 : vector<1x128xf32>
    %c0_27 = arith.constant 0 : index
    %c5_28 = arith.constant 5 : index
    %c0_29 = arith.constant 0 : index
    %136 = vector.load %arg4[%c0_27, %c5_28, %c0_29] : memref<4x8x128xf32, #tpu.memory_space<vmem>>, vector<1x1x128xf32>
    %137 = vector.shape_cast %136 : vector<1x1x128xf32> to vector<1x128xf32>
    %138 = vector.shape_cast %135 : vector<1x128xf32> to vector<1x1x128xf32>
    tpu.vector_store %arg4[%c0_27, %c5_28, %c0_29], %138 {strides = array<i32>} : memref<4x8x128xf32, #tpu.memory_space<vmem>>, vector<1x1x128xf32>,
    %139 = arith.index_cast %21 : i32 to index
    %c0_30 = arith.constant 0 : index
    %140 = vector.load %arg2[%139, %c0_30] : memref<64x128xf32, #tpu.memory_space<vmem>>, vector<1x128xf32>
    %c6 = arith.constant 6 : index
    %c0_31 = arith.constant 0 : index
    %141 = vector.load %arg3[%c6, %c0_31] : memref<8x128xf32, #tpu.memory_space<vmem>>, vector<1x128xf32>
    %142 = arith.addf %140, %141 : vector<1x128xf32>
    %c0_32 = arith.constant 0 : index
    %c6_33 = arith.constant 6 : index
    %c0_34 = arith.constant 0 : index
    %143 = vector.load %arg4[%c0_32, %c6_33, %c0_34] : memref<4x8x128xf32, #tpu.memory_space<vmem>>, vector<1x1x128xf32>
    %144 = vector.shape_cast %143 : vector<1x1x128xf32> to vector<1x128xf32>
    %145 = vector.shape_cast %142 : vector<1x128xf32> to vector<1x1x128xf32>
    tpu.vector_store %arg4[%c0_32, %c6_33, %c0_34], %145 {strides = array<i32>} : memref<4x8x128xf32, #tpu.memory_space<vmem>>, vector<1x1x128xf32>,
    %146 = arith.index_cast %24 : i32 to index
    %c0_35 = arith.constant 0 : index
    %147 = vector.load %arg2[%146, %c0_35] : memref<64x128xf32, #tpu.memory_space<vmem>>, vector<1x128xf32>
    %c7 = arith.constant 7 : index
    %c0_36 = arith.constant 0 : index
    %148 = vector.load %arg3[%c7, %c0_36] : memref<8x128xf32, #tpu.memory_space<vmem>>, vector<1x128xf32>
    %149 = arith.addf %147, %148 : vector<1x128xf32>
    %c0_37 = arith.constant 0 : index
    %c7_38 = arith.constant 7 : index
    %c0_39 = arith.constant 0 : index
    %150 = vector.load %arg4[%c0_37, %c7_38, %c0_39] : memref<4x8x128xf32, #tpu.memory_space<vmem>>, vector<1x1x128xf32>
    %151 = vector.shape_cast %150 : vector<1x1x128xf32> to vector<1x128xf32>
    %152 = vector.shape_cast %149 : vector<1x128xf32> to vector<1x1x128xf32>
    tpu.vector_store %arg4[%c0_37, %c7_38, %c0_39], %152 {strides = array<i32>} : memref<4x8x128xf32, #tpu.memory_space<vmem>>, vector<1x1x128xf32>,
    %153 = arith.index_cast %27 : i32 to index
    %c0_40 = arith.constant 0 : index
    %154 = vector.load %arg2[%153, %c0_40] : memref<64x128xf32, #tpu.memory_space<vmem>>, vector<1x128xf32>
    %c0_41 = arith.constant 0 : index
    %c0_42 = arith.constant 0 : index
    %155 = vector.load %arg3[%c0_41, %c0_42] : memref<8x128xf32, #tpu.memory_space<vmem>>, vector<1x128xf32>
    %156 = arith.addf %154, %155 : vector<1x128xf32>
    %c1_43 = arith.constant 1 : index
    %c0_44 = arith.constant 0 : index
    %c0_45 = arith.constant 0 : index
    %157 = vector.load %arg4[%c1_43, %c0_44, %c0_45] : memref<4x8x128xf32, #tpu.memory_space<vmem>>, vector<1x1x128xf32>
    %158 = vector.shape_cast %157 : vector<1x1x128xf32> to vector<1x128xf32>
    %159 = vector.shape_cast %156 : vector<1x128xf32> to vector<1x1x128xf32>
    tpu.vector_store %arg4[%c1_43, %c0_44, %c0_45], %159 {strides = array<i32>} : memref<4x8x128xf32, #tpu.memory_space<vmem>>, vector<1x1x128xf32>,
    %160 = arith.index_cast %30 : i32 to index
    %c0_46 = arith.constant 0 : index
    %161 = vector.load %arg2[%160, %c0_46] : memref<64x128xf32, #tpu.memory_space<vmem>>, vector<1x128xf32>
    %c1_47 = arith.constant 1 : index
    %c0_48 = arith.constant 0 : index
    %162 = vector.load %arg3[%c1_47, %c0_48] : memref<8x128xf32, #tpu.memory_space<vmem>>, vector<1x128xf32>
    %163 = arith.addf %161, %162 : vector<1x128xf32>
    %c1_49 = arith.constant 1 : index
    %c1_50 = arith.constant 1 : index
    %c0_51 = arith.constant 0 : index
    %164 = vector.load %arg4[%c1_49, %c1_50, %c0_51] : memref<4x8x128xf32, #tpu.memory_space<vmem>>, vector<1x1x128xf32>
    %165 = vector.shape_cast %164 : vector<1x1x128xf32> to vector<1x128xf32>
    %166 = vector.shape_cast %163 : vector<1x128xf32> to vector<1x1x128xf32>
    tpu.vector_store %arg4[%c1_49, %c1_50, %c0_51], %166 {strides = array<i32>} : memref<4x8x128xf32, #tpu.memory_space<vmem>>, vector<1x1x128xf32>,
    %167 = arith.index_cast %33 : i32 to index
    %c0_52 = arith.constant 0 : index
    %168 = vector.load %arg2[%167, %c0_52] : memref<64x128xf32, #tpu.memory_space<vmem>>, vector<1x128xf32>
    %c2_53 = arith.constant 2 : index
    %c0_54 = arith.constant 0 : index
    %169 = vector.load %arg3[%c2_53, %c0_54] : memref<8x128xf32, #tpu.memory_space<vmem>>, vector<1x128xf32>
    %170 = arith.addf %168, %169 : vector<1x128xf32>
    %c1_55 = arith.constant 1 : index
    %c2_56 = arith.constant 2 : index
    %c0_57 = arith.constant 0 : index
    %171 = vector.load %arg4[%c1_55, %c2_56, %c0_57] : memref<4x8x128xf32, #tpu.memory_space<vmem>>, vector<1x1x128xf32>
    %172 = vector.shape_cast %171 : vector<1x1x128xf32> to vector<1x128xf32>
    %173 = vector.shape_cast %170 : vector<1x128xf32> to vector<1x1x128xf32>
    tpu.vector_store %arg4[%c1_55, %c2_56, %c0_57], %173 {strides = array<i32>} : memref<4x8x128xf32, #tpu.memory_space<vmem>>, vector<1x1x128xf32>,
    %174 = arith.index_cast %36 : i32 to index
    %c0_58 = arith.constant 0 : index
    %175 = vector.load %arg2[%174, %c0_58] : memref<64x128xf32, #tpu.memory_space<vmem>>, vector<1x128xf32>
    %c3_59 = arith.constant 3 : index
    %c0_60 = arith.constant 0 : index
    %176 = vector.load %arg3[%c3_59, %c0_60] : memref<8x128xf32, #tpu.memory_space<vmem>>, vector<1x128xf32>
    %177 = arith.addf %175, %176 : vector<1x128xf32>
    %c1_61 = arith.constant 1 : index
    %c3_62 = arith.constant 3 : index
    %c0_63 = arith.constant 0 : index
    %178 = vector.load %arg4[%c1_61, %c3_62, %c0_63] : memref<4x8x128xf32, #tpu.memory_space<vmem>>, vector<1x1x128xf32>
    %179 = vector.shape_cast %178 : vector<1x1x128xf32> to vector<1x128xf32>
    %180 = vector.shape_cast %177 : vector<1x128xf32> to vector<1x1x128xf32>
    tpu.vector_store %arg4[%c1_61, %c3_62, %c0_63], %180 {strides = array<i32>} : memref<4x8x128xf32, #tpu.memory_space<vmem>>, vector<1x1x128xf32>,
    %181 = arith.index_cast %39 : i32 to index
    %c0_64 = arith.constant 0 : index
    %182 = vector.load %arg2[%181, %c0_64] : memref<64x128xf32, #tpu.memory_space<vmem>>, vector<1x128xf32>
    %c4_65 = arith.constant 4 : index
    %c0_66 = arith.constant 0 : index
    %183 = vector.load %arg3[%c4_65, %c0_66] : memref<8x128xf32, #tpu.memory_space<vmem>>, vector<1x128xf32>
    %184 = arith.addf %182, %183 : vector<1x128xf32>
    %c1_67 = arith.constant 1 : index
    %c4_68 = arith.constant 4 : index
    %c0_69 = arith.constant 0 : index
    %185 = vector.load %arg4[%c1_67, %c4_68, %c0_69] : memref<4x8x128xf32, #tpu.memory_space<vmem>>, vector<1x1x128xf32>
    %186 = vector.shape_cast %185 : vector<1x1x128xf32> to vector<1x128xf32>
    %187 = vector.shape_cast %184 : vector<1x128xf32> to vector<1x1x128xf32>
    tpu.vector_store %arg4[%c1_67, %c4_68, %c0_69], %187 {strides = array<i32>} : memref<4x8x128xf32, #tpu.memory_space<vmem>>, vector<1x1x128xf32>,
    %188 = arith.index_cast %42 : i32 to index
    %c0_70 = arith.constant 0 : index
    %189 = vector.load %arg2[%188, %c0_70] : memref<64x128xf32, #tpu.memory_space<vmem>>, vector<1x128xf32>
    %c5_71 = arith.constant 5 : index
    %c0_72 = arith.constant 0 : index
    %190 = vector.load %arg3[%c5_71, %c0_72] : memref<8x128xf32, #tpu.memory_space<vmem>>, vector<1x128xf32>
    %191 = arith.addf %189, %190 : vector<1x128xf32>
    %c1_73 = arith.constant 1 : index
    %c5_74 = arith.constant 5 : index
    %c0_75 = arith.constant 0 : index
    %192 = vector.load %arg4[%c1_73, %c5_74, %c0_75] : memref<4x8x128xf32, #tpu.memory_space<vmem>>, vector<1x1x128xf32>
    %193 = vector.shape_cast %192 : vector<1x1x128xf32> to vector<1x128xf32>
    %194 = vector.shape_cast %191 : vector<1x128xf32> to vector<1x1x128xf32>
    tpu.vector_store %arg4[%c1_73, %c5_74, %c0_75], %194 {strides = array<i32>} : memref<4x8x128xf32, #tpu.memory_space<vmem>>, vector<1x1x128xf32>,
    %195 = arith.index_cast %45 : i32 to index
    %c0_76 = arith.constant 0 : index
    %196 = vector.load %arg2[%195, %c0_76] : memref<64x128xf32, #tpu.memory_space<vmem>>, vector<1x128xf32>
    %c6_77 = arith.constant 6 : index
    %c0_78 = arith.constant 0 : index
    %197 = vector.load %arg3[%c6_77, %c0_78] : memref<8x128xf32, #tpu.memory_space<vmem>>, vector<1x128xf32>
    %198 = arith.addf %196, %197 : vector<1x128xf32>
    %c1_79 = arith.constant 1 : index
    %c6_80 = arith.constant 6 : index
    %c0_81 = arith.constant 0 : index
    %199 = vector.load %arg4[%c1_79, %c6_80, %c0_81] : memref<4x8x128xf32, #tpu.memory_space<vmem>>, vector<1x1x128xf32>
    %200 = vector.shape_cast %199 : vector<1x1x128xf32> to vector<1x128xf32>
    %201 = vector.shape_cast %198 : vector<1x128xf32> to vector<1x1x128xf32>
    tpu.vector_store %arg4[%c1_79, %c6_80, %c0_81], %201 {strides = array<i32>} : memref<4x8x128xf32, #tpu.memory_space<vmem>>, vector<1x1x128xf32>,
    %202 = arith.index_cast %48 : i32 to index
    %c0_82 = arith.constant 0 : index
    %203 = vector.load %arg2[%202, %c0_82] : memref<64x128xf32, #tpu.memory_space<vmem>>, vector<1x128xf32>
    %c7_83 = arith.constant 7 : index
    %c0_84 = arith.constant 0 : index
    %204 = vector.load %arg3[%c7_83, %c0_84] : memref<8x128xf32, #tpu.memory_space<vmem>>, vector<1x128xf32>
    %205 = arith.addf %203, %204 : vector<1x128xf32>
    %c1_85 = arith.constant 1 : index
    %c7_86 = arith.constant 7 : index
    %c0_87 = arith.constant 0 : index
    %206 = vector.load %arg4[%c1_85, %c7_86, %c0_87] : memref<4x8x128xf32, #tpu.memory_space<vmem>>, vector<1x1x128xf32>
    %207 = vector.shape_cast %206 : vector<1x1x128xf32> to vector<1x128xf32>
    %208 = vector.shape_cast %205 : vector<1x128xf32> to vector<1x1x128xf32>
    tpu.vector_store %arg4[%c1_85, %c7_86, %c0_87], %208 {strides = array<i32>} : memref<4x8x128xf32, #tpu.memory_space<vmem>>, vector<1x1x128xf32>,
    %209 = arith.index_cast %51 : i32 to index
    %c0_88 = arith.constant 0 : index
    %210 = vector.load %arg2[%209, %c0_88] : memref<64x128xf32, #tpu.memory_space<vmem>>, vector<1x128xf32>
    %c0_89 = arith.constant 0 : index
    %c0_90 = arith.constant 0 : index
    %211 = vector.load %arg3[%c0_89, %c0_90] : memref<8x128xf32, #tpu.memory_space<vmem>>, vector<1x128xf32>
    %212 = arith.addf %210, %211 : vector<1x128xf32>
    %c2_91 = arith.constant 2 : index
    %c0_92 = arith.constant 0 : index
    %c0_93 = arith.constant 0 : index
    %213 = vector.load %arg4[%c2_91, %c0_92, %c0_93] : memref<4x8x128xf32, #tpu.memory_space<vmem>>, vector<1x1x128xf32>
    %214 = vector.shape_cast %213 : vector<1x1x128xf32> to vector<1x128xf32>
    %215 = vector.shape_cast %212 : vector<1x128xf32> to vector<1x1x128xf32>
    tpu.vector_store %arg4[%c2_91, %c0_92, %c0_93], %215 {strides = array<i32>} : memref<4x8x128xf32, #tpu.memory_space<vmem>>, vector<1x1x128xf32>,
    %216 = arith.index_cast %54 : i32 to index
    %c0_94 = arith.constant 0 : index
    %217 = vector.load %arg2[%216, %c0_94] : memref<64x128xf32, #tpu.memory_space<vmem>>, vector<1x128xf32>
    %c1_95 = arith.constant 1 : index
    %c0_96 = arith.constant 0 : index
    %218 = vector.load %arg3[%c1_95, %c0_96] : memref<8x128xf32, #tpu.memory_space<vmem>>, vector<1x128xf32>
    %219 = arith.addf %217, %218 : vector<1x128xf32>
    %c2_97 = arith.constant 2 : index
    %c1_98 = arith.constant 1 : index
    %c0_99 = arith.constant 0 : index
    %220 = vector.load %arg4[%c2_97, %c1_98, %c0_99] : memref<4x8x128xf32, #tpu.memory_space<vmem>>, vector<1x1x128xf32>
    %221 = vector.shape_cast %220 : vector<1x1x128xf32> to vector<1x128xf32>
    %222 = vector.shape_cast %219 : vector<1x128xf32> to vector<1x1x128xf32>
    tpu.vector_store %arg4[%c2_97, %c1_98, %c0_99], %222 {strides = array<i32>} : memref<4x8x128xf32, #tpu.memory_space<vmem>>, vector<1x1x128xf32>,
    %223 = arith.index_cast %57 : i32 to index
    %c0_100 = arith.constant 0 : index
    %224 = vector.load %arg2[%223, %c0_100] : memref<64x128xf32, #tpu.memory_space<vmem>>, vector<1x128xf32>
    %c2_101 = arith.constant 2 : index
    %c0_102 = arith.constant 0 : index
    %225 = vector.load %arg3[%c2_101, %c0_102] : memref<8x128xf32, #tpu.memory_space<vmem>>, vector<1x128xf32>
    %226 = arith.addf %224, %225 : vector<1x128xf32>
    %c2_103 = arith.constant 2 : index
    %c2_104 = arith.constant 2 : index
    %c0_105 = arith.constant 0 : index
    %227 = vector.load %arg4[%c2_103, %c2_104, %c0_105] : memref<4x8x128xf32, #tpu.memory_space<vmem>>, vector<1x1x128xf32>
    %228 = vector.shape_cast %227 : vector<1x1x128xf32> to vector<1x128xf32>
    %229 = vector.shape_cast %226 : vector<1x128xf32> to vector<1x1x128xf32>
    tpu.vector_store %arg4[%c2_103, %c2_104, %c0_105], %229 {strides = array<i32>} : memref<4x8x128xf32, #tpu.memory_space<vmem>>, vector<1x1x128xf32>,
    %230 = arith.index_cast %60 : i32 to index
    %c0_106 = arith.constant 0 : index
    %231 = vector.load %arg2[%230, %c0_106] : memref<64x128xf32, #tpu.memory_space<vmem>>, vector<1x128xf32>
    %c3_107 = arith.constant 3 : index
    %c0_108 = arith.constant 0 : index
    %232 = vector.load %arg3[%c3_107, %c0_108] : memref<8x128xf32, #tpu.memory_space<vmem>>, vector<1x128xf32>
    %233 = arith.addf %231, %232 : vector<1x128xf32>
    %c2_109 = arith.constant 2 : index
    %c3_110 = arith.constant 3 : index
    %c0_111 = arith.constant 0 : index
    %234 = vector.load %arg4[%c2_109, %c3_110, %c0_111] : memref<4x8x128xf32, #tpu.memory_space<vmem>>, vector<1x1x128xf32>
    %235 = vector.shape_cast %234 : vector<1x1x128xf32> to vector<1x128xf32>
    %236 = vector.shape_cast %233 : vector<1x128xf32> to vector<1x1x128xf32>
    tpu.vector_store %arg4[%c2_109, %c3_110, %c0_111], %236 {strides = array<i32>} : memref<4x8x128xf32, #tpu.memory_space<vmem>>, vector<1x1x128xf32>,
    %237 = arith.index_cast %63 : i32 to index
    %c0_112 = arith.constant 0 : index
    %238 = vector.load %arg2[%237, %c0_112] : memref<64x128xf32, #tpu.memory_space<vmem>>, vector<1x128xf32>
    %c4_113 = arith.constant 4 : index
    %c0_114 = arith.constant 0 : index
    %239 = vector.load %arg3[%c4_113, %c0_114] : memref<8x128xf32, #tpu.memory_space<vmem>>, vector<1x128xf32>
    %240 = arith.addf %238, %239 : vector<1x128xf32>
    %c2_115 = arith.constant 2 : index
    %c4_116 = arith.constant 4 : index
    %c0_117 = arith.constant 0 : index
    %241 = vector.load %arg4[%c2_115, %c4_116, %c0_117] : memref<4x8x128xf32, #tpu.memory_space<vmem>>, vector<1x1x128xf32>
    %242 = vector.shape_cast %241 : vector<1x1x128xf32> to vector<1x128xf32>
    %243 = vector.shape_cast %240 : vector<1x128xf32> to vector<1x1x128xf32>
    tpu.vector_store %arg4[%c2_115, %c4_116, %c0_117], %243 {strides = array<i32>} : memref<4x8x128xf32, #tpu.memory_space<vmem>>, vector<1x1x128xf32>,
    %244 = arith.index_cast %66 : i32 to index
    %c0_118 = arith.constant 0 : index
    %245 = vector.load %arg2[%244, %c0_118] : memref<64x128xf32, #tpu.memory_space<vmem>>, vector<1x128xf32>
    %c5_119 = arith.constant 5 : index
    %c0_120 = arith.constant 0 : index
    %246 = vector.load %arg3[%c5_119, %c0_120] : memref<8x128xf32, #tpu.memory_space<vmem>>, vector<1x128xf32>
    %247 = arith.addf %245, %246 : vector<1x128xf32>
    %c2_121 = arith.constant 2 : index
    %c5_122 = arith.constant 5 : index
    %c0_123 = arith.constant 0 : index
    %248 = vector.load %arg4[%c2_121, %c5_122, %c0_123] : memref<4x8x128xf32, #tpu.memory_space<vmem>>, vector<1x1x128xf32>
    %249 = vector.shape_cast %248 : vector<1x1x128xf32> to vector<1x128xf32>
    %250 = vector.shape_cast %247 : vector<1x128xf32> to vector<1x1x128xf32>
    tpu.vector_store %arg4[%c2_121, %c5_122, %c0_123], %250 {strides = array<i32>} : memref<4x8x128xf32, #tpu.memory_space<vmem>>, vector<1x1x128xf32>,
    %251 = arith.index_cast %69 : i32 to index
    %c0_124 = arith.constant 0 : index
    %252 = vector.load %arg2[%251, %c0_124] : memref<64x128xf32, #tpu.memory_space<vmem>>, vector<1x128xf32>
    %c6_125 = arith.constant 6 : index
    %c0_126 = arith.constant 0 : index
    %253 = vector.load %arg3[%c6_125, %c0_126] : memref<8x128xf32, #tpu.memory_space<vmem>>, vector<1x128xf32>
    %254 = arith.addf %252, %253 : vector<1x128xf32>
    %c2_127 = arith.constant 2 : index
    %c6_128 = arith.constant 6 : index
    %c0_129 = arith.constant 0 : index
    %255 = vector.load %arg4[%c2_127, %c6_128, %c0_129] : memref<4x8x128xf32, #tpu.memory_space<vmem>>, vector<1x1x128xf32>
    %256 = vector.shape_cast %255 : vector<1x1x128xf32> to vector<1x128xf32>
    %257 = vector.shape_cast %254 : vector<1x128xf32> to vector<1x1x128xf32>
    tpu.vector_store %arg4[%c2_127, %c6_128, %c0_129], %257 {strides = array<i32>} : memref<4x8x128xf32, #tpu.memory_space<vmem>>, vector<1x1x128xf32>,
    %258 = arith.index_cast %72 : i32 to index
    %c0_130 = arith.constant 0 : index
    %259 = vector.load %arg2[%258, %c0_130] : memref<64x128xf32, #tpu.memory_space<vmem>>, vector<1x128xf32>
    %c7_131 = arith.constant 7 : index
    %c0_132 = arith.constant 0 : index
    %260 = vector.load %arg3[%c7_131, %c0_132] : memref<8x128xf32, #tpu.memory_space<vmem>>, vector<1x128xf32>
    %261 = arith.addf %259, %260 : vector<1x128xf32>
    %c2_133 = arith.constant 2 : index
    %c7_134 = arith.constant 7 : index
    %c0_135 = arith.constant 0 : index
    %262 = vector.load %arg4[%c2_133, %c7_134, %c0_135] : memref<4x8x128xf32, #tpu.memory_space<vmem>>, vector<1x1x128xf32>
    %263 = vector.shape_cast %262 : vector<1x1x128xf32> to vector<1x128xf32>
    %264 = vector.shape_cast %261 : vector<1x128xf32> to vector<1x1x128xf32>
    tpu.vector_store %arg4[%c2_133, %c7_134, %c0_135], %264 {strides = array<i32>} : memref<4x8x128xf32, #tpu.memory_space<vmem>>, vector<1x1x128xf32>,
    %265 = arith.index_cast %75 : i32 to index
    %c0_136 = arith.constant 0 : index
    %266 = vector.load %arg2[%265, %c0_136] : memref<64x128xf32, #tpu.memory_space<vmem>>, vector<1x128xf32>
    %c0_137 = arith.constant 0 : index
    %c0_138 = arith.constant 0 : index
    %267 = vector.load %arg3[%c0_137, %c0_138] : memref<8x128xf32, #tpu.memory_space<vmem>>, vector<1x128xf32>
    %268 = arith.addf %266, %267 : vector<1x128xf32>
    %c3_139 = arith.constant 3 : index
    %c0_140 = arith.constant 0 : index
    %c0_141 = arith.constant 0 : index
    %269 = vector.load %arg4[%c3_139, %c0_140, %c0_141] : memref<4x8x128xf32, #tpu.memory_space<vmem>>, vector<1x1x128xf32>
    %270 = vector.shape_cast %269 : vector<1x1x128xf32> to vector<1x128xf32>
    %271 = vector.shape_cast %268 : vector<1x128xf32> to vector<1x1x128xf32>
    tpu.vector_store %arg4[%c3_139, %c0_140, %c0_141], %271 {strides = array<i32>} : memref<4x8x128xf32, #tpu.memory_space<vmem>>, vector<1x1x128xf32>,
    %272 = arith.index_cast %78 : i32 to index
    %c0_142 = arith.constant 0 : index
    %273 = vector.load %arg2[%272, %c0_142] : memref<64x128xf32, #tpu.memory_space<vmem>>, vector<1x128xf32>
    %c1_143 = arith.constant 1 : index
    %c0_144 = arith.constant 0 : index
    %274 = vector.load %arg3[%c1_143, %c0_144] : memref<8x128xf32, #tpu.memory_space<vmem>>, vector<1x128xf32>
    %275 = arith.addf %273, %274 : vector<1x128xf32>
    %c3_145 = arith.constant 3 : index
    %c1_146 = arith.constant 1 : index
    %c0_147 = arith.constant 0 : index
    %276 = vector.load %arg4[%c3_145, %c1_146, %c0_147] : memref<4x8x128xf32, #tpu.memory_space<vmem>>, vector<1x1x128xf32>
    %277 = vector.shape_cast %276 : vector<1x1x128xf32> to vector<1x128xf32>
    %278 = vector.shape_cast %275 : vector<1x128xf32> to vector<1x1x128xf32>
    tpu.vector_store %arg4[%c3_145, %c1_146, %c0_147], %278 {strides = array<i32>} : memref<4x8x128xf32, #tpu.memory_space<vmem>>, vector<1x1x128xf32>,
    %279 = arith.index_cast %81 : i32 to index
    %c0_148 = arith.constant 0 : index
    %280 = vector.load %arg2[%279, %c0_148] : memref<64x128xf32, #tpu.memory_space<vmem>>, vector<1x128xf32>
    %c2_149 = arith.constant 2 : index
    %c0_150 = arith.constant 0 : index
    %281 = vector.load %arg3[%c2_149, %c0_150] : memref<8x128xf32, #tpu.memory_space<vmem>>, vector<1x128xf32>
    %282 = arith.addf %280, %281 : vector<1x128xf32>
    %c3_151 = arith.constant 3 : index
    %c2_152 = arith.constant 2 : index
    %c0_153 = arith.constant 0 : index
    %283 = vector.load %arg4[%c3_151, %c2_152, %c0_153] : memref<4x8x128xf32, #tpu.memory_space<vmem>>, vector<1x1x128xf32>
    %284 = vector.shape_cast %283 : vector<1x1x128xf32> to vector<1x128xf32>
    %285 = vector.shape_cast %282 : vector<1x128xf32> to vector<1x1x128xf32>
    tpu.vector_store %arg4[%c3_151, %c2_152, %c0_153], %285 {strides = array<i32>} : memref<4x8x128xf32, #tpu.memory_space<vmem>>, vector<1x1x128xf32>,
    %286 = arith.index_cast %84 : i32 to index
    %c0_154 = arith.constant 0 : index
    %287 = vector.load %arg2[%286, %c0_154] : memref<64x128xf32, #tpu.memory_space<vmem>>, vector<1x128xf32>
    %c3_155 = arith.constant 3 : index
    %c0_156 = arith.constant 0 : index
    %288 = vector.load %arg3[%c3_155, %c0_156] : memref<8x128xf32, #tpu.memory_space<vmem>>, vector<1x128xf32>
    %289 = arith.addf %287, %288 : vector<1x128xf32>
    %c3_157 = arith.constant 3 : index
    %c3_158 = arith.constant 3 : index
    %c0_159 = arith.constant 0 : index
    %290 = vector.load %arg4[%c3_157, %c3_158, %c0_159] : memref<4x8x128xf32, #tpu.memory_space<vmem>>, vector<1x1x128xf32>
    %291 = vector.shape_cast %290 : vector<1x1x128xf32> to vector<1x128xf32>
    %292 = vector.shape_cast %289 : vector<1x128xf32> to vector<1x1x128xf32>
    tpu.vector_store %arg4[%c3_157, %c3_158, %c0_159], %292 {strides = array<i32>} : memref<4x8x128xf32, #tpu.memory_space<vmem>>, vector<1x1x128xf32>,
    %293 = arith.index_cast %87 : i32 to index
    %c0_160 = arith.constant 0 : index
    %294 = vector.load %arg2[%293, %c0_160] : memref<64x128xf32, #tpu.memory_space<vmem>>, vector<1x128xf32>
    %c4_161 = arith.constant 4 : index
    %c0_162 = arith.constant 0 : index
    %295 = vector.load %arg3[%c4_161, %c0_162] : memref<8x128xf32, #tpu.memory_space<vmem>>, vector<1x128xf32>
    %296 = arith.addf %294, %295 : vector<1x128xf32>
    %c3_163 = arith.constant 3 : index
    %c4_164 = arith.constant 4 : index
    %c0_165 = arith.constant 0 : index
    %297 = vector.load %arg4[%c3_163, %c4_164, %c0_165] : memref<4x8x128xf32, #tpu.memory_space<vmem>>, vector<1x1x128xf32>
    %298 = vector.shape_cast %297 : vector<1x1x128xf32> to vector<1x128xf32>
    %299 = vector.shape_cast %296 : vector<1x128xf32> to vector<1x1x128xf32>
    tpu.vector_store %arg4[%c3_163, %c4_164, %c0_165], %299 {strides = array<i32>} : memref<4x8x128xf32, #tpu.memory_space<vmem>>, vector<1x1x128xf32>,
    %300 = arith.index_cast %90 : i32 to index
    %c0_166 = arith.constant 0 : index
    %301 = vector.load %arg2[%300, %c0_166] : memref<64x128xf32, #tpu.memory_space<vmem>>, vector<1x128xf32>
    %c5_167 = arith.constant 5 : index
    %c0_168 = arith.constant 0 : index
    %302 = vector.load %arg3[%c5_167, %c0_168] : memref<8x128xf32, #tpu.memory_space<vmem>>, vector<1x128xf32>
    %303 = arith.addf %301, %302 : vector<1x128xf32>
    %c3_169 = arith.constant 3 : index
    %c5_170 = arith.constant 5 : index
    %c0_171 = arith.constant 0 : index
    %304 = vector.load %arg4[%c3_169, %c5_170, %c0_171] : memref<4x8x128xf32, #tpu.memory_space<vmem>>, vector<1x1x128xf32>
    %305 = vector.shape_cast %304 : vector<1x1x128xf32> to vector<1x128xf32>
    %306 = vector.shape_cast %303 : vector<1x128xf32> to vector<1x1x128xf32>
    tpu.vector_store %arg4[%c3_169, %c5_170, %c0_171], %306 {strides = array<i32>} : memref<4x8x128xf32, #tpu.memory_space<vmem>>, vector<1x1x128xf32>,
    %307 = arith.index_cast %93 : i32 to index
    %c0_172 = arith.constant 0 : index
    %308 = vector.load %arg2[%307, %c0_172] : memref<64x128xf32, #tpu.memory_space<vmem>>, vector<1x128xf32>
    %c6_173 = arith.constant 6 : index
    %c0_174 = arith.constant 0 : index
    %309 = vector.load %arg3[%c6_173, %c0_174] : memref<8x128xf32, #tpu.memory_space<vmem>>, vector<1x128xf32>
    %310 = arith.addf %308, %309 : vector<1x128xf32>
    %c3_175 = arith.constant 3 : index
    %c6_176 = arith.constant 6 : index
    %c0_177 = arith.constant 0 : index
    %311 = vector.load %arg4[%c3_175, %c6_176, %c0_177] : memref<4x8x128xf32, #tpu.memory_space<vmem>>, vector<1x1x128xf32>
    %312 = vector.shape_cast %311 : vector<1x1x128xf32> to vector<1x128xf32>
    %313 = vector.shape_cast %310 : vector<1x128xf32> to vector<1x1x128xf32>
    tpu.vector_store %arg4[%c3_175, %c6_176, %c0_177], %313 {strides = array<i32>} : memref<4x8x128xf32, #tpu.memory_space<vmem>>, vector<1x1x128xf32>,
    %314 = arith.index_cast %96 : i32 to index
    %c0_178 = arith.constant 0 : index
    %315 = vector.load %arg2[%314, %c0_178] : memref<64x128xf32, #tpu.memory_space<vmem>>, vector<1x128xf32>
    %c7_179 = arith.constant 7 : index
    %c0_180 = arith.constant 0 : index
    %316 = vector.load %arg3[%c7_179, %c0_180] : memref<8x128xf32, #tpu.memory_space<vmem>>, vector<1x128xf32>
    %317 = arith.addf %315, %316 : vector<1x128xf32>
    %c3_181 = arith.constant 3 : index
    %c7_182 = arith.constant 7 : index
    %c0_183 = arith.constant 0 : index
    %318 = vector.load %arg4[%c3_181, %c7_182, %c0_183] : memref<4x8x128xf32, #tpu.memory_space<vmem>>, vector<1x1x128xf32>
    %319 = vector.shape_cast %318 : vector<1x1x128xf32> to vector<1x128xf32>
    %320 = vector.shape_cast %317 : vector<1x128xf32> to vector<1x1x128xf32>
    tpu.vector_store %arg4[%c3_181, %c7_182, %c0_183], %320 {strides = array<i32>} : memref<4x8x128xf32, #tpu.memory_space<vmem>>, vector<1x1x128xf32>,
    return
  }
  func.func @transform_0(%arg0: i32, %arg1: memref<32xi32, #tpu.memory_space<smem>>) -> (i32, i32) {
    %c0_i32 = arith.constant 0 : i32
    %c0_i32_0 = arith.constant 0 : i32
    %c0_i32_1 = arith.constant 0 : i32
    return %c0_i32, %c0_i32_0 : i32, i32
  }
  func.func @transform_1(%arg0: i32, %arg1: memref<32xi32, #tpu.memory_space<smem>>) -> (i32, i32) {
    %c0_i32 = arith.constant 0 : i32
    %c0_i32_0 = arith.constant 0 : i32
    %c0_i32_1 = arith.constant 0 : i32
    return %c0_i32, %c0_i32_0 : i32, i32
  }
  func.func @transform_2(%arg0: i32, %arg1: memref<32xi32, #tpu.memory_space<smem>>) -> (i32, i32, i32) {
    %c0_i32 = arith.constant 0 : i32
    %c0_i32_0 = arith.constant 0 : i32
    %c0_i32_1 = arith.constant 0 : i32
    return %arg0, %c0_i32, %c0_i32_0 : i32, i32, i32
  }
}

</mosaic_0001>

<llo_original>
// kernel: tpu_custom_call.1
$region0: #{tpu_custom_call.1}
  #allocation0 [shape = 'u32[]', space=smem, size = 0x4, offset = 0x4, fixed_abs, tag = 'smem constant byte address 0x4 - core index']
  #allocation1 [shape = 'u32[72,128]{1,0:T(1,128)}', space=vmem, size = 0x9000, scoped, tag = 'internal scratch']
  #allocation2 [shape = 's32[1]{0}', space=sflag, size = 0x4, scoped, tag = 'scoped memory for tpu_custom_call.1']
  #allocation3 [shape = 'u8[512]{0}', space=smem, size = 0x200, scoped, tag = 'prefetched SMEM operand 0']
  %s0 = inlined_call_operand.hbm [shape: s32[32], index: 0, kind: input, shape index: {}]
  %s1 = inlined_call_operand.hbm [shape: f32[64,128], index: 1, kind: input, shape index: {}]
  %s2 = inlined_call_operand.hbm [shape: f32[8,128], index: 2, kind: input, shape index: {}]
  %s3 = inlined_call_operand.hbm [shape: f32[4,8,128], index: 3, kind: output, shape index: {}]
  %s4 = sld [smem:[#allocation0]]
  $region26: #{tpu_custom_call.1} parent=0
    _
  %s6 = ssub.s32 1, %s4
  %s7 = scalar_select 0, %s6, %s4
  %s9 = sshll.u32 %s0, 4
  %s10 = int_to_ptr.hbm [resolvable:$true] %s9
  %12 = dma.hbm_to_smem %s10, 16, [#allocation3], [#allocation2]
  %14 = dma.done [#allocation2], 16
  %15 = sfence
  $region1: #{tpu_custom_call.1} parent=0
    #allocation4 [shape = 'u8[32768]{0}', space=vmem, size = 0x8000, scoped, tag = 'input window, operand 1, single buffered']
    #allocation5 [shape = 's32[1]{0}', space=sflag, size = 0x4, scoped, tag = 'scoped memory for tpu_custom_call.1']
    #allocation6 [shape = 's32[1]{0}', space=sflag, size = 0x4, scoped, tag = 'scoped memory for tpu_custom_call.1']
    #allocation7 [shape = 'u8[4096]{0}', space=vmem, size = 0x1000, scoped, tag = 'input window, operand 2, single buffered']
    #allocation8 [shape = 's32[1]{0}', space=sflag, size = 0x4, scoped, tag = 'scoped memory for tpu_custom_call.1']
    #allocation9 [shape = 'u8[16384]{0}', space=vmem, size = 0x4000, scoped, tag = 'output window, operand 0, single buffered']
    %16 = vsyncpa [#allocation5], 0
    %17 = vsyncpa [#allocation8], 0
    %18 = vsyncpa [#allocation6], 0
    // Predicated region
    $region2: #{tpu_custom_call.1} parent=1 // pred_check
      _
    $region3: #{tpu_custom_call.1} parent=1 // pred_check_branch
      %20 = sbr.rel (0) target = $region5
    $region4: #{tpu_custom_call.1} parent=1 // pred_region
      %22 = vsyncadd [#allocation5], 0
      %s23 = sshll.u32 %s1, 4
      %s24 = int_to_ptr.hbm [resolvable:$true] %s23
      %s25 = sshll.u32 [#allocation4], 4
      %s26 = int_to_ptr.vmem [resolvable:$true] %s25
      %31 = dma.hbm_to_vmem [thread:$0]  %s24, 1024, %s26, [#allocation5], 128, 128, 8
    $region5: #{tpu_custom_call.1} parent=1 // pred_fallthru
      _
    // Predicated region
    $region6: #{tpu_custom_call.1} parent=1 // pred_check
      _
    $region7: #{tpu_custom_call.1} parent=1 // pred_check_branch
      %33 = sbr.rel (0) target = $region9
    $region8: #{tpu_custom_call.1} parent=1 // pred_region
      %35 = vsyncadd [#allocation8], 0
      %s37 = sshll.u32 %s2, 4
      %s38 = int_to_ptr.hbm [resolvable:$true] %s37
      %s39 = sshll.u32 [#allocation7], 4
      %s40 = int_to_ptr.vmem [resolvable:$true] %s39
      %42 = dma.hbm_to_vmem [thread:$0]  %s38, 128, %s40, [#allocation8]
    $region9: #{tpu_custom_call.1} parent=1 // pred_fallthru
      _
    // Predicated region
    $region10: #{tpu_custom_call.1} parent=1 // pred_check
      _
    $region11: #{tpu_custom_call.1} parent=1 // pred_check_branch
      %44 = sbr.rel (0) target = $region13
    $region12: #{tpu_custom_call.1} parent=1 // pred_region
      %46 = dma.done [#allocation5], 1024
    $region13: #{tpu_custom_call.1} parent=1 // pred_fallthru
      _
    // Predicated region
    $region14: #{tpu_custom_call.1} parent=1 // pred_check
      _
    $region15: #{tpu_custom_call.1} parent=1 // pred_check_branch
      %48 = sbr.rel (0) target = $region17
    $region16: #{tpu_custom_call.1} parent=1 // pred_region
      %50 = dma.done [#allocation8], 128
    $region17: #{tpu_custom_call.1} parent=1 // pred_fallthru
      _
    %s51 = smul.u32 0, 32
    %s52 = sld [smem:[#allocation3 + %s51]]
    %s53 = sadd.s32 %s51, 1
    %s54 = sld [smem:[#allocation3 + %s53]]
    %s55 = sadd.s32 %s51, 2
    %s56 = sld [smem:[#allocation3 + %s55]]
    %s57 = sadd.s32 %s51, 3
    %s58 = sld [smem:[#allocation3 + %s57]]
    %s59 = sadd.s32 %s51, 4
    %s60 = sld [smem:[#allocation3 + %s59]]
    %s61 = sadd.s32 %s51, 5
    %s62 = sld [smem:[#allocation3 + %s61]]
    %s63 = sadd.s32 %s51, 6
    %s64 = sld [smem:[#allocation3 + %s63]]
    %s65 = sadd.s32 %s51, 7
    %s66 = sld [smem:[#allocation3 + %s65]]
    %s67 = sadd.s32 %s51, 8
    %s68 = sld [smem:[#allocation3 + %s67]]
    %s69 = sadd.s32 %s51, 9
    %s70 = sld [smem:[#allocation3 + %s69]]
    %s71 = sadd.s32 %s51, 10
    %s72 = sld [smem:[#allocation3 + %s71]]
    %s73 = sadd.s32 %s51, 11
    %s74 = sld [smem:[#allocation3 + %s73]]
    %s75 = sadd.s32 %s51, 12
    %s76 = sld [smem:[#allocation3 + %s75]]
    %s77 = sadd.s32 %s51, 13
    %s78 = sld [smem:[#allocation3 + %s77]]
    %s79 = sadd.s32 %s51, 14
    %s80 = sld [smem:[#allocation3 + %s79]]
    %s81 = sadd.s32 %s51, 15
    %s82 = sld [smem:[#allocation3 + %s81]]
    %s83 = sadd.s32 %s51, 16
    %s84 = sld [smem:[#allocation3 + %s83]]
    %s85 = sadd.s32 %s51, 17
    %s86 = sld [smem:[#allocation3 + %s85]]
    %s87 = sadd.s32 %s51, 18
    %s88 = sld [smem:[#allocation3 + %s87]]
    %s89 = sadd.s32 %s51, 19
    %s90 = sld [smem:[#allocation3 + %s89]]
    %s91 = sadd.s32 %s51, 20
    %s92 = sld [smem:[#allocation3 + %s91]]
    %s93 = sadd.s32 %s51, 21
    %s94 = sld [smem:[#allocation3 + %s93]]
    %s95 = sadd.s32 %s51, 22
    %s96 = sld [smem:[#allocation3 + %s95]]
    %s97 = sadd.s32 %s51, 23
    %s98 = sld [smem:[#allocation3 + %s97]]
    %s99 = sadd.s32 %s51, 24
    %s100 = sld [smem:[#allocation3 + %s99]]
    %s101 = sadd.s32 %s51, 25
    %s102 = sld [smem:[#allocation3 + %s101]]
    %s103 = sadd.s32 %s51, 26
    %s104 = sld [smem:[#allocation3 + %s103]]
    %s105 = sadd.s32 %s51, 27
    %s106 = sld [smem:[#allocation3 + %s105]]
    %s107 = sadd.s32 %s51, 28
    %s108 = sld [smem:[#allocation3 + %s107]]
    %s109 = sadd.s32 %s51, 29
    %s110 = sld [smem:[#allocation3 + %s109]]
    %s111 = sadd.s32 %s51, 30
    %s112 = sld [smem:[#allocation3 + %s111]]
    %s113 = sadd.s32 %s51, 31
    %s114 = sld [smem:[#allocation3 + %s113]]
    %s115 = scalar_lea.vmem [#allocation4], %s52
    %v116 = vld [vmem:[%s115] sm:$0x1]
    %v117 = vld [vmem:[#allocation7] sm:$0x1]
    %v118 = vadd.f32 %v116, %v117
    %119 = vst [vmem:[#allocation9] sm:$0x1] %v118
    %s120 = scalar_lea.vmem [#allocation4], %s54
    %v121 = vld [vmem:[%s120] sm:$0x1]
    %v122 = vld [vmem:[#allocation7 + $0x1] sm:$0x1]
    %v123 = vadd.f32 %v121, %v122
    %124 = vst [vmem:[#allocation9 + $0x1] sm:$0x1] %v123
    %s125 = scalar_lea.vmem [#allocation4], %s56
    %v126 = vld [vmem:[%s125] sm:$0x1]
    %v127 = vld [vmem:[#allocation7 + $0x2] sm:$0x1]
    %v128 = vadd.f32 %v126, %v127
    %129 = vst [vmem:[#allocation9 + $0x2] sm:$0x1] %v128
    %s130 = scalar_lea.vmem [#allocation4], %s58
    %v131 = vld [vmem:[%s130] sm:$0x1]
    %v132 = vld [vmem:[#allocation7 + $0x3] sm:$0x1]
    %v133 = vadd.f32 %v131, %v132
    %134 = vst [vmem:[#allocation9 + $0x3] sm:$0x1] %v133
    %s135 = scalar_lea.vmem [#allocation4], %s60
    %v136 = vld [vmem:[%s135] sm:$0x1]
    %v137 = vld [vmem:[#allocation7 + $0x4] sm:$0x1]
    %v138 = vadd.f32 %v136, %v137
    %139 = vst [vmem:[#allocation9 + $0x4] sm:$0x1] %v138
    %s140 = scalar_lea.vmem [#allocation4], %s62
    %v141 = vld [vmem:[%s140] sm:$0x1]
    %v142 = vld [vmem:[#allocation7 + $0x5] sm:$0x1]
    %v143 = vadd.f32 %v141, %v142
    %144 = vst [vmem:[#allocation9 + $0x5] sm:$0x1] %v143
    %s145 = scalar_lea.vmem [#allocation4], %s64
    %v146 = vld [vmem:[%s145] sm:$0x1]
    %v147 = vld [vmem:[#allocation7 + $0x6] sm:$0x1]
    %v148 = vadd.f32 %v146, %v147
    %149 = vst [vmem:[#allocation9 + $0x6] sm:$0x1] %v148
    %s150 = scalar_lea.vmem [#allocation4], %s66
    %v151 = vld [vmem:[%s150] sm:$0x1]
    %v152 = vld [vmem:[#allocation7 + $0x7] sm:$0x1]
    %v153 = vadd.f32 %v151, %v152
    %154 = vst [vmem:[#allocation9 + $0x7] sm:$0x1] %v153
    %s155 = scalar_lea.vmem [#allocation4], %s68
    %v156 = vld [vmem:[%s155] sm:$0x1]
    %v157 = vld [vmem:[#allocation7] sm:$0x1]
    %v158 = vadd.f32 %v156, %v157
    %s159 = scalar_lea.vmem [#allocation9], 8
    %160 = vst [vmem:[%s159] sm:$0x1] %v158
    %s161 = scalar_lea.vmem [#allocation4], %s70
    %v162 = vld [vmem:[%s161] sm:$0x1]
    %v163 = vld [vmem:[#allocation7 + $0x1] sm:$0x1]
    %v164 = vadd.f32 %v162, %v163
    %165 = vst [vmem:[%s159 + $0x1] sm:$0x1] %v164
    %s166 = scalar_lea.vmem [#allocation4], %s72
    %v167 = vld [vmem:[%s166] sm:$0x1]
    %v168 = vld [vmem:[#allocation7 + $0x2] sm:$0x1]
    %v169 = vadd.f32 %v167, %v168
    %170 = vst [vmem:[%s159 + $0x2] sm:$0x1] %v169
    %s171 = scalar_lea.vmem [#allocation4], %s74
    %v172 = vld [vmem:[%s171] sm:$0x1]
    %v173 = vld [vmem:[#allocation7 + $0x3] sm:$0x1]
    %v174 = vadd.f32 %v172, %v173
    %175 = vst [vmem:[%s159 + $0x3] sm:$0x1] %v174
    %s176 = scalar_lea.vmem [#allocation4], %s76
    %v177 = vld [vmem:[%s176] sm:$0x1]
    %v178 = vld [vmem:[#allocation7 + $0x4] sm:$0x1]
    %v179 = vadd.f32 %v177, %v178
    %180 = vst [vmem:[%s159 + $0x4] sm:$0x1] %v179
    %s181 = scalar_lea.vmem [#allocation4], %s78
    %v182 = vld [vmem:[%s181] sm:$0x1]
    %v183 = vld [vmem:[#allocation7 + $0x5] sm:$0x1]
    %v184 = vadd.f32 %v182, %v183
    %185 = vst [vmem:[%s159 + $0x5] sm:$0x1] %v184
    %s186 = scalar_lea.vmem [#allocation4], %s80
    %v187 = vld [vmem:[%s186] sm:$0x1]
    %v188 = vld [vmem:[#allocation7 + $0x6] sm:$0x1]
    %v189 = vadd.f32 %v187, %v188
    %190 = vst [vmem:[%s159 + $0x6] sm:$0x1] %v189
    %s191 = scalar_lea.vmem [#allocation4], %s82
    %v192 = vld [vmem:[%s191] sm:$0x1]
    %v193 = vld [vmem:[#allocation7 + $0x7] sm:$0x1]
    %v194 = vadd.f32 %v192, %v193
    %195 = vst [vmem:[%s159 + $0x7] sm:$0x1] %v194
    %s196 = scalar_lea.vmem [#allocation4], %s84
    %v197 = vld [vmem:[%s196] sm:$0x1]
    %v198 = vld [vmem:[#allocation7] sm:$0x1]
    %v199 = vadd.f32 %v197, %v198
    %s200 = scalar_lea.vmem [#allocation9], 16
    %201 = vst [vmem:[%s200] sm:$0x1] %v199
    %s202 = scalar_lea.vmem [#allocation4], %s86
    %v203 = vld [vmem:[%s202] sm:$0x1]
    %v204 = vld [vmem:[#allocation7 + $0x1] sm:$0x1]
    %v205 = vadd.f32 %v203, %v204
    %206 = vst [vmem:[%s200 + $0x1] sm:$0x1] %v205
    %s207 = scalar_lea.vmem [#allocation4], %s88
    %v208 = vld [vmem:[%s207] sm:$0x1]
    %v209 = vld [vmem:[#allocation7 + $0x2] sm:$0x1]
    %v210 = vadd.f32 %v208, %v209
    %211 = vst [vmem:[%s200 + $0x2] sm:$0x1] %v210
    %s212 = scalar_lea.vmem [#allocation4], %s90
    %v213 = vld [vmem:[%s212] sm:$0x1]
    %v214 = vld [vmem:[#allocation7 + $0x3] sm:$0x1]
    %v215 = vadd.f32 %v213, %v214
    %216 = vst [vmem:[%s200 + $0x3] sm:$0x1] %v215
    %s217 = scalar_lea.vmem [#allocation4], %s92
    %v218 = vld [vmem:[%s217] sm:$0x1]
    %v219 = vld [vmem:[#allocation7 + $0x4] sm:$0x1]
    %v220 = vadd.f32 %v218, %v219
    %221 = vst [vmem:[%s200 + $0x4] sm:$0x1] %v220
    %s222 = scalar_lea.vmem [#allocation4], %s94
    %v223 = vld [vmem:[%s222] sm:$0x1]
    %v224 = vld [vmem:[#allocation7 + $0x5] sm:$0x1]
    %v225 = vadd.f32 %v223, %v224
    %226 = vst [vmem:[%s200 + $0x5] sm:$0x1] %v225
    %s227 = scalar_lea.vmem [#allocation4], %s96
    %v228 = vld [vmem:[%s227] sm:$0x1]
    %v229 = vld [vmem:[#allocation7 + $0x6] sm:$0x1]
    %v230 = vadd.f32 %v228, %v229
    %231 = vst [vmem:[%s200 + $0x6] sm:$0x1] %v230
    %s232 = scalar_lea.vmem [#allocation4], %s98
    %v233 = vld [vmem:[%s232] sm:$0x1]
    %v234 = vld [vmem:[#allocation7 + $0x7] sm:$0x1]
    %v235 = vadd.f32 %v233, %v234
    %236 = vst [vmem:[%s200 + $0x7] sm:$0x1] %v235
    %s237 = scalar_lea.vmem [#allocation4], %s100
    %v238 = vld [vmem:[%s237] sm:$0x1]
    %v239 = vld [vmem:[#allocation7] sm:$0x1]
    %v240 = vadd.f32 %v238, %v239
    %s241 = scalar_lea.vmem [#allocation9], 24
    %242 = vst [vmem:[%s241] sm:$0x1] %v240
    %s243 = scalar_lea.vmem [#allocation4], %s102
    %v244 = vld [vmem:[%s243] sm:$0x1]
    %v245 = vld [vmem:[#allocation7 + $0x1] sm:$0x1]
    %v246 = vadd.f32 %v244, %v245
    %247 = vst [vmem:[%s241 + $0x1] sm:$0x1] %v246
    %s248 = scalar_lea.vmem [#allocation4], %s104
    %v249 = vld [vmem:[%s248] sm:$0x1]
    %v250 = vld [vmem:[#allocation7 + $0x2] sm:$0x1]
    %v251 = vadd.f32 %v249, %v250
    %252 = vst [vmem:[%s241 + $0x2] sm:$0x1] %v251
    %s253 = scalar_lea.vmem [#allocation4], %s106
    %v254 = vld [vmem:[%s253] sm:$0x1]
    %v255 = vld [vmem:[#allocation7 + $0x3] sm:$0x1]
    %v256 = vadd.f32 %v254, %v255
    %257 = vst [vmem:[%s241 + $0x3] sm:$0x1] %v256
    %s258 = scalar_lea.vmem [#allocation4], %s108
    %v259 = vld [vmem:[%s258] sm:$0x1]
    %v260 = vld [vmem:[#allocation7 + $0x4] sm:$0x1]
    %v261 = vadd.f32 %v259, %v260
    %262 = vst [vmem:[%s241 + $0x4] sm:$0x1] %v261
    %s263 = scalar_lea.vmem [#allocation4], %s110
    %v264 = vld [vmem:[%s263] sm:$0x1]
    %v265 = vld [vmem:[#allocation7 + $0x5] sm:$0x1]
    %v266 = vadd.f32 %v264, %v265
    %267 = vst [vmem:[%s241 + $0x5] sm:$0x1] %v266
    %s268 = scalar_lea.vmem [#allocation4], %s112
    %v269 = vld [vmem:[%s268] sm:$0x1]
    %v270 = vld [vmem:[#allocation7 + $0x6] sm:$0x1]
    %v271 = vadd.f32 %v269, %v270
    %272 = vst [vmem:[%s241 + $0x6] sm:$0x1] %v271
    %s273 = scalar_lea.vmem [#allocation4], %s114
    %v274 = vld [vmem:[%s273] sm:$0x1]
    %v275 = vld [vmem:[#allocation7 + $0x7] sm:$0x1]
    %v276 = vadd.f32 %v274, %v275
    %277 = vst [vmem:[%s241 + $0x7] sm:$0x1] %v276
    // Predicated region
    $region18: #{tpu_custom_call.1} parent=1 // pred_check
      _
    $region19: #{tpu_custom_call.1} parent=1 // pred_check_branch
      %279 = sbr.rel (0) target = $region21
    $region20: #{tpu_custom_call.1} parent=1 // pred_region
      %281 = vsyncadd [#allocation6], 0
      %s282 = sshll.u32 [#allocation9], 4
      %s283 = int_to_ptr.vmem [resolvable:$true] %s282
      %s284 = sshll.u32 %s3, 4
      %s285 = int_to_ptr.hbm [resolvable:$true] %s284
      %290 = dma.vmem_to_hbm [thread:$0]  %s283, 512, %s285, [#allocation6], 128, 128, 8
    $region21: #{tpu_custom_call.1} parent=1 // pred_fallthru
      _
    // Predicated region
    $region22: #{tpu_custom_call.1} parent=1 // pred_check
      _
    $region23: #{tpu_custom_call.1} parent=1 // pred_check_branch
      %292 = sbr.rel (0) target = $region25
    $region24: #{tpu_custom_call.1} parent=1 // pred_region
      %294 = dma.done [#allocation6], 512
    $region25: #{tpu_custom_call.1} parent=1 // pred_fallthru
      _
    %295 = vsyncpa [#allocation5], 1
    %296 = vsyncpa [#allocation8], 1
    %297 = vsyncpa [#allocation6], 1

</llo_original>
